<compile_context>
chip_gen: v6e
topology: v6e:2x2x1
jax: 0.10.0
libtpu: 0.0.40
codegen_flags: <defaults>
</compile_context>

<pallas_src>
import functools

import jax
import jax.numpy as jnp
from jax.experimental import pallas as pl
from jax.experimental.pallas import tpu as pltpu


def _residual_block_kernel(x_ref, w1_ref, b1_ref, w2_ref, b2_ref, o_ref):
    # linear1: MXU matmul in the operands' native dtype (f32 or bf16), f32 accum.
    y = jnp.dot(x_ref[...], w1_ref[...], preferred_element_type=jnp.float32)
    y = y + b1_ref[...]          # (1, D) f32 bias row, implicit broadcast over rows
    y = y * y                    # quadratic non-linearity in f32

    # linear2: cast the f32 intermediate to the weight dtype for the MXU, f32 accum.
    y = jnp.dot(y.astype(w2_ref.dtype), w2_ref[...],
                preferred_element_type=jnp.float32)
    y = y + b2_ref[...]
    y = y * y

    # TODO(synk): dropout with p > 0 in training mode would need pltpu.prng_seed /
    # pltpu.prng_random_bits; module default p=0.0 (and eval mode) is the identity.

    # Residual: re-read the x tile here instead of keeping an f32 copy live across
    # both matmuls (shorter vreg live range, no spill pressure at large tiles).
    o_ref[...] = (y + x_ref[...].astype(jnp.float32)).astype(o_ref.dtype)


def _round_up(v, m):
    return (v + m - 1) // m * m


def _pick_tile_n(n_rows, d_pad, row_align, compute_itemsize, out_itemsize,
                 budget_bytes=20 * 1024 * 1024):
    """Largest row tile (<= 512, multiple of row_align) whose per-step VMEM working
    set (double-buffered x/out tiles + resident W1/W2 + f32 intermediate) fits well
    under the default scoped-VMEM limit on all TPU generations (incl. v7x 64 MiB)."""
    fixed = 2 * 2 * d_pad * d_pad * compute_itemsize        # W1 + W2 (x2 buffers)
    fixed += 2 * 2 * d_pad * 4                              # biases (f32)
    tile = 512
    while tile > row_align:
        per = 2 * tile * d_pad * compute_itemsize           # x tile, double-buffered
        per += 2 * tile * d_pad * out_itemsize              # out tile, double-buffered
        per += 2 * tile * d_pad * 4                         # f32 intermediates
        if fixed + per <= budget_bytes:
            break
        tile //= 2
    tile = max(row_align, tile)
    return min(tile, _round_up(n_rows, row_align))


@functools.partial(jax.jit, static_argnames=("compute_dtype",))
def residual_block(x, w1, b1, w2, b2, *, compute_dtype=None):
    """x: [N, D]; w1, w2: [D, D] (pre-transposed to [in, out]); b1, b2: [D].

    compute_dtype: dtype of the MXU matmul operands (pass jnp.bfloat16 for 2-4x
    MXU throughput with f32 accumulation). Defaults to x.dtype.
    """
    out_dtype = x.dtype
    n, d_in = x.shape
    d_out = w1.shape[1]
    assert d_in == d_out, "residual add requires in_dim == out_dim"

    if compute_dtype is None:
        compute_dtype = x.dtype
    compute_dtype = jnp.dtype(compute_dtype)
    itemsize = compute_dtype.itemsize
    # native sublane tile: 8 rows for f32, 16 for bf16, 32 for 8-bit dtypes
    row_align = max(8, (8 * 4) // itemsize)

    # Lane-dense feature dim: pad D to a multiple of 128 so the output store is an
    # unmasked full-lane vst and MXU columns are not wasted. Zero padding is exact:
    # padded columns stay identically zero through both layers and the residual.
    d_pad = _round_up(d_out, 128)

    tile_n = _pick_tile_n(n, d_pad, row_align, itemsize, jnp.dtype(out_dtype).itemsize)
    n_pad = _round_up(n, tile_n)
    grid_n = n_pad // tile_n

    x_p = jnp.pad(x, ((0, n_pad - n), (0, d_pad - d_in))).astype(compute_dtype)
    w1_p = jnp.pad(w1, ((0, d_pad - d_in), (0, d_pad - d_out))).astype(compute_dtype)
    w2_p = jnp.pad(w2, ((0, d_pad - d_out), (0, d_pad - d_out))).astype(compute_dtype)
    b1_p = jnp.pad(b1, (0, d_pad - d_out)).reshape(1, d_pad).astype(jnp.float32)
    b2_p = jnp.pad(b2, (0, d_pad - d_out)).reshape(1, d_pad).astype(jnp.float32)

    # TODO(synk): for very large D (full DxD weights no longer fitting VMEM,
    # especially on v7x's 64 MiB), add a K-dim grid axis ("arbitrary", last) with a
    # VMEM accumulator + pl.when init/finalize instead of keeping full weights resident.

    cost = pl.CostEstimate(
        flops=2 * (2 * n_pad * d_pad * d_pad),
        transcendentals=0,
        bytes_accessed=(n_pad * d_pad * (itemsize + jnp.dtype(out_dtype).itemsize)
                        + 2 * d_pad * d_pad * itemsize
                        + 2 * d_pad * 4),
    )

    out = pl.pallas_call(
        _residual_block_kernel,
        out_shape=jax.ShapeDtypeStruct((n_pad, d_pad), out_dtype),
        grid_spec=pl.GridSpec(
            grid=(grid_n,),
            in_specs=[
                pl.BlockSpec((tile_n, d_pad), lambda i: (i, 0)),   # x tile (pipelined)
                pl.BlockSpec((d_pad, d_pad), lambda i: (0, 0)),    # W1 (resident)
                pl.BlockSpec((1, d_pad), lambda i: (0, 0)),        # b1
                pl.BlockSpec((d_pad, d_pad), lambda i: (0, 0)),    # W2 (resident)
                pl.BlockSpec((1, d_pad), lambda i: (0, 0)),        # b2
            ],
            out_specs=pl.BlockSpec((tile_n, d_pad), lambda i: (i, 0)),
        ),
        compiler_params=pltpu.CompilerParams(
            dimension_semantics=("parallel",),   # row tiles are independent (v7x: 2 TCs)
        ),
        cost_estimate=cost,
    )(x_p, w1_p, b1_p, w2_p, b2_p)

    return out[:n, :d_out]


def _init_linear(key, in_dim, out_dim, dtype=jnp.float32):
    """Deterministic init mimicking torch.nn.Linear (uniform +-1/sqrt(in_dim)).
    Returns weight already transposed to [in_dim, out_dim]."""
    kw, kb = jax.random.split(key)
    bound = 1.0 / jnp.sqrt(jnp.float32(in_dim))
    w_t = jax.random.uniform(kw, (in_dim, out_dim), dtype, -bound, bound)
    b = jax.random.uniform(kb, (out_dim,), dtype, -bound, bound)
    return w_t, b


def _reference(x, w1, b1, w2, b2, compute_dtype=None):
    """Pure-JAX reference mirroring the kernel's operand dtypes."""
    cd = jnp.dtype(compute_dtype) if compute_dtype is not None else x.dtype
    xc = x.astype(cd)
    y = jnp.dot(xc, w1.astype(cd), preferred_element_type=jnp.float32) + b1
    y = y * y
    y = jnp.dot(y.astype(cd), w2.astype(cd), preferred_element_type=jnp.float32) + b2
    y = y * y
    return (y + xc.astype(jnp.float32)).astype(x.dtype)


if __name__ == "__main__":
    key = jax.random.PRNGKey(0)
    k_x, k_l1, k_l2 = jax.random.split(key, 3)

    N, D = 8, 32  # batch=8, in_dim=out_dim=32 (residual requires equal dims)
    x = jax.random.normal(k_x, (N, D), jnp.float32)
    w1, b1 = _init_linear(k_l1, D, D)
    w2, b2 = _init_linear(k_l2, D, D)

    # 1) full-f32 path: check against the pure f32 reference
    out_f32 = jax.block_until_ready(residual_block(x, w1, b1, w2, b2))
    ref_f32 = _reference(x, w1, b1, w2, b2)
    assert out_f32.shape == (N, D)
    assert jnp.allclose(out_f32, ref_f32, atol=1e-3, rtol=1e-3)

    # 2) bf16-operand / f32-accumulation path (the fast MXU configuration);
    #    compare against a reference using the same operand dtypes.
    out_bf16 = jax.block_until_ready(
        residual_block(x, w1, b1, w2, b2, compute_dtype=jnp.bfloat16))
    ref_bf16 = _reference(x, w1, b1, w2, b2, compute_dtype=jnp.bfloat16)
    assert out_bf16.shape == (N, D)
    assert jnp.allclose(out_bf16, ref_bf16, atol=2e-2, rtol=2e-2)

    print("KERNEL_OK")
</pallas_src>

<mosaic_0001>
module attributes {stable_mosaic.version = 11 : i64} {
  func.func @_residual_block_kernel(%arg0: i32, %arg1: memref<8x128xf32, #tpu.memory_space<vmem>>, %arg2: memref<128x128xf32, #tpu.memory_space<vmem>>, %arg3: memref<1x128xf32, #tpu.memory_space<vmem>>, %arg4: memref<128x128xf32, #tpu.memory_space<vmem>>, %arg5: memref<1x128xf32, #tpu.memory_space<vmem>>, %arg6: memref<8x128xf32, #tpu.memory_space<vmem>>) attributes {dimension_semantics = [#tpu.dimension_semantics<parallel>], iteration_bounds = array<i64: 1>, scalar_prefetch = 0 : i64, scratch_operands = 0 : i64, tpu.core_type = #tpu.core_type<tc>, window_params = [{transform_indices = @transform_0, window_bounds = array<i64: 8, 128>}, {pipeline_mode = #tpu.pipeline_mode<synchronous>, transform_indices = @transform_1, window_bounds = array<i64: 128, 128>}, {pipeline_mode = #tpu.pipeline_mode<synchronous>, transform_indices = @transform_2, window_bounds = array<i64: 1, 128>}, {pipeline_mode = #tpu.pipeline_mode<synchronous>, transform_indices = @transform_3, window_bounds = array<i64: 128, 128>}, {pipeline_mode = #tpu.pipeline_mode<synchronous>, transform_indices = @transform_4, window_bounds = array<i64: 1, 128>}, {transform_indices = @transform_5, window_bounds = array<i64: 8, 128>}]} {
    %c0 = arith.constant 0 : index
    %c0_0 = arith.constant 0 : index
    %0 = vector.load %arg1[%c0, %c0_0] : memref<8x128xf32, #tpu.memory_space<vmem>>, vector<8x128xf32>
    %c0_1 = arith.constant 0 : index
    %c0_2 = arith.constant 0 : index
    %1 = vector.load %arg2[%c0_1, %c0_2] : memref<128x128xf32, #tpu.memory_space<vmem>>, vector<128x128xf32>
    %cst = arith.constant dense<0.000000e+00> : vector<8x128xf32>
    %2 = tpu.matmul %0, %1, %cst {dimension_numbers = #tpu.dot_dimension_numbers<[1], [0], [0], [1], [0, 0, 1, 1], [], []>} : vector<8x128xf32>, vector<128x128xf32>, vector<8x128xf32> -> vector<8x128xf32>
    %c0_3 = arith.constant 0 : index
    %c0_4 = arith.constant 0 : index
    %3 = vector.load %arg3[%c0_3, %c0_4] : memref<1x128xf32, #tpu.memory_space<vmem>>, vector<1x128xf32>
    %4 = vector.broadcast %3 : vector<1x128xf32> to vector<8x128xf32>
    %5 = arith.addf %2, %4 : vector<8x128xf32>
    %6 = arith.mulf %5, %5 : vector<8x128xf32>
    %c0_5 = arith.constant 0 : index
    %c0_6 = arith.constant 0 : index
    %7 = vector.load %arg4[%c0_5, %c0_6] : memref<128x128xf32, #tpu.memory_space<vmem>>, vector<128x128xf32>
    %cst_7 = arith.constant dense<0.000000e+00> : vector<8x128xf32>
    %8 = tpu.matmul %6, %7, %cst_7 {dimension_numbers = #tpu.dot_dimension_numbers<[1], [0], [0], [1], [0, 0, 1, 1], [], []>} : vector<8x128xf32>, vector<128x128xf32>, vector<8x128xf32> -> vector<8x128xf32>
    %c0_8 = arith.constant 0 : index
    %c0_9 = arith.constant 0 : index
    %9 = vector.load %arg5[%c0_8, %c0_9] : memref<1x128xf32, #tpu.memory_space<vmem>>, vector<1x128xf32>
    %10 = vector.broadcast %9 : vector<1x128xf32> to vector<8x128xf32>
    %11 = arith.addf %8, %10 : vector<8x128xf32>
    %12 = arith.mulf %11, %11 : vector<8x128xf32>
    %c0_10 = arith.constant 0 : index
    %c0_11 = arith.constant 0 : index
    %13 = vector.load %arg1[%c0_10, %c0_11] : memref<8x128xf32, #tpu.memory_space<vmem>>, vector<8x128xf32>
    %14 = arith.addf %12, %13 : vector<8x128xf32>
    %c0_12 = arith.constant 0 : index
    %c0_13 = arith.constant 0 : index
    %15 = vector.load %arg6[%c0_12, %c0_13] : memref<8x128xf32, #tpu.memory_space<vmem>>, vector<8x128xf32>
    tpu.vector_store %arg6[%c0_12, %c0_13], %14 {strides = array<i32>} : memref<8x128xf32, #tpu.memory_space<vmem>>, vector<8x128xf32>,
    return
  }
  func.func @transform_0(%arg0: i32) -> (i32, i32) {
    %c0_i32 = arith.constant 0 : i32
    %c0_i32_0 = arith.constant 0 : i32
    return %arg0, %c0_i32 : i32, i32
  }
  func.func @transform_1(%arg0: i32) -> (i32, i32) {
    %c0_i32 = arith.constant 0 : i32
    %c0_i32_0 = arith.constant 0 : i32
    %c0_i32_1 = arith.constant 0 : i32
    return %c0_i32, %c0_i32_0 : i32, i32
  }
  func.func @transform_2(%arg0: i32) -> (i32, i32) {
    %c0_i32 = arith.constant 0 : i32
    %c0_i32_0 = arith.constant 0 : i32
    %c0_i32_1 = arith.constant 0 : i32
    return %c0_i32, %c0_i32_0 : i32, i32
  }
  func.func @transform_3(%arg0: i32) -> (i32, i32) {
    %c0_i32 = arith.constant 0 : i32
    %c0_i32_0 = arith.constant 0 : i32
    %c0_i32_1 = arith.constant 0 : i32
    return %c0_i32, %c0_i32_0 : i32, i32
  }
  func.func @transform_4(%arg0: i32) -> (i32, i32) {
    %c0_i32 = arith.constant 0 : i32
    %c0_i32_0 = arith.constant 0 : i32
    %c0_i32_1 = arith.constant 0 : i32
    return %c0_i32, %c0_i32_0 : i32, i32
  }
  func.func @transform_5(%arg0: i32) -> (i32, i32) {
    %c0_i32 = arith.constant 0 : i32
    %c0_i32_0 = arith.constant 0 : i32
    return %arg0, %c0_i32 : i32, i32
  }
}

</mosaic_0001>

<llo_original>
// kernel: residual_block.1
$region0: #{residual_block.1}
  #allocation0 [shape = 'u32[]', space=smem, size = 0x4, offset = 0x4, fixed_abs, tag = 'smem constant byte address 0x4 - core index']
  #allocation1 [shape = 'u32[144,128]{1,0:T(1,128)}', space=vmem, size = 0x12000, scoped, tag = 'internal scratch']
  %s0 = inlined_call_operand.vmem [shape: f32[8,128], index: 0, kind: input, shape index: {}]
  %s1 = inlined_call_operand.vmem [shape: f32[128,128], index: 1, kind: input, shape index: {}]
  %s2 = inlined_call_operand.vmem [shape: f32[1,128], index: 2, kind: input, shape index: {}]
  %s3 = inlined_call_operand.vmem [shape: f32[128,128], index: 3, kind: input, shape index: {}]
  %s4 = inlined_call_operand.vmem [shape: f32[1,128], index: 4, kind: input, shape index: {}]
  %s5 = inlined_call_operand.hbm [shape: f32[8,128], index: 5, kind: output, shape index: {}]
  %s6 = sld [smem:[#allocation0]]
  $region30: #{residual_block.1} parent=0
    _
  %s8 = ssub.s32 1, %s6
  %s9 = scalar_select 0, %s8, %s6
  $region1: #{residual_block.1} parent=0
    #allocation2 [shape = 'u8[4096]{0}', space=vmem, size = 0x1000, scoped, tag = 'output window, operand 0, single buffered']
    #allocation3 [shape = 's32[1]{0}', space=sflag, size = 0x4, scoped, tag = 'scoped memory for residual_block.1']
    %10 = vsyncpa [#allocation3], 0
    // Predicated region
    $region2: #{residual_block.1} parent=1 // pred_check
      _
    $region3: #{residual_block.1} parent=1 // pred_check_branch
      %12 = sbr.rel (0) target = $region5
    $region4: #{residual_block.1} parent=1 // pred_region
      _
    $region5: #{residual_block.1} parent=1 // pred_fallthru
      _
    // Predicated region
    $region6: #{residual_block.1} parent=1 // pred_check
      _
    $region7: #{residual_block.1} parent=1 // pred_check_branch
      %14 = sbr.rel (0) target = $region9
    $region8: #{residual_block.1} parent=1 // pred_region
      _
    $region9: #{residual_block.1} parent=1 // pred_fallthru
      _
    // Predicated region
    $region10: #{residual_block.1} parent=1 // pred_check
      _
    $region11: #{residual_block.1} parent=1 // pred_check_branch
      %16 = sbr.rel (0) target = $region13
    $region12: #{residual_block.1} parent=1 // pred_region
      _
    $region13: #{residual_block.1} parent=1 // pred_fallthru
      _
    // Predicated region
    $region14: #{residual_block.1} parent=1 // pred_check
      _
    $region15: #{residual_block.1} parent=1 // pred_check_branch
      %18 = sbr.rel (0) target = $region17
    $region16: #{residual_block.1} parent=1 // pred_region
      _
    $region17: #{residual_block.1} parent=1 // pred_fallthru
      _
    // Predicated region
    $region18: #{residual_block.1} parent=1 // pred_check
      _
    $region19: #{residual_block.1} parent=1 // pred_check_branch
      %20 = sbr.rel (0) target = $region21
    $region20: #{residual_block.1} parent=1 // pred_region
      _
    $region21: #{residual_block.1} parent=1 // pred_fallthru
      _
    %v21 = vld [vmem:[%s0] sm:$0xff]
    %v22 = vld [vmem:[%s1] sm:$0xff]
    %v23 = vld [vmem:[%s1 + $0x8] sm:$0xff]
    %v24 = vld [vmem:[%s1 + $0x10] sm:$0xff]
    %v25 = vld [vmem:[%s1 + $0x18] sm:$0xff]
    %v26 = vld [vmem:[%s1 + $0x20] sm:$0xff]
    %v27 = vld [vmem:[%s1 + $0x28] sm:$0xff]
    %v28 = vld [vmem:[%s1 + $0x30] sm:$0xff]
    %v29 = vld [vmem:[%s1 + $0x38] sm:$0xff]
    %v30 = vld [vmem:[%s1 + $0x40] sm:$0xff]
    %v31 = vld [vmem:[%s1 + $0x48] sm:$0xff]
    %v32 = vld [vmem:[%s1 + $0x50] sm:$0xff]
    %v33 = vld [vmem:[%s1 + $0x58] sm:$0xff]
    %v34 = vld [vmem:[%s1 + $0x60] sm:$0xff]
    %v35 = vld [vmem:[%s1 + $0x68] sm:$0xff]
    %v36 = vld [vmem:[%s1 + $0x70] sm:$0xff]
    %v37 = vld [vmem:[%s1 + $0x78] sm:$0xff]
    %v38 = vld [vmem:[%s2] sm:$0x1]
    %v40 = vlaneseq
    %v41 = vshrl.u32 %v40, 7
    %v42 = vsub.s32 0, %v41
    %v43 = vrot.slane %v38, %v42
    %45 = vmatprep.subr.mxu0 0.0
    %46 = vmatpush1.msra.mxu0 %v37
    %47 = vmatprep.subr.mxu0 0.0
    %48 = vmatpush1.msra.mxu0 %v36
    %49 = vmatprep.subr.mxu0 0.0
    %50 = vmatpush1.msra.mxu0 %v35
    %51 = vmatprep.subr.mxu0 0.0
    %52 = vmatpush1.msra.mxu0 %v34
    %53 = vmatprep.subr.mxu0 0.0
    %54 = vmatpush1.msra.mxu0 %v33
    %55 = vmatprep.subr.mxu0 0.0
    %56 = vmatpush1.msra.mxu0 %v32
    %57 = vmatprep.subr.mxu0 0.0
    %58 = vmatpush1.msra.mxu0 %v31
    %59 = vmatprep.subr.mxu0 0.0
    %60 = vmatpush1.msra.mxu0 %v30
    %61 = vmatprep.subr.mxu0 0.0
    %62 = vmatpush1.msra.mxu0 %v29
    %63 = vmatprep.subr.mxu0 0.0
    %64 = vmatpush1.msra.mxu0 %v28
    %65 = vmatprep.subr.mxu0 0.0
    %66 = vmatpush1.msra.mxu0 %v27
    %67 = vmatprep.subr.mxu0 0.0
    %68 = vmatpush1.msra.mxu0 %v26
    %69 = vmatprep.subr.mxu0 0.0
    %70 = vmatpush1.msra.mxu0 %v25
    %71 = vmatprep.subr.mxu0 0.0
    %72 = vmatpush1.msra.mxu0 %v24
    %73 = vmatprep.subr.mxu0 0.0
    %74 = vmatpush1.msra.mxu0 %v23
    %75 = vmatprep.subr.mxu0 0.0
    %76 = vmatpush1.msra.mxu0 %v22
    %77 = vmatprep.subr.mxu0 0.0
    %78 = vmatpush2.msra.mxu0 0.0
    %79 = vmatprep.subr.mxu0 0.0
    %80 = vmatpush2.msra.mxu0 0.0
    %81 = vmatprep.subr.mxu0 0.0
    %82 = vmatpush2.msra.mxu0 0.0
    %83 = vmatprep.subr.mxu0 0.0
    %84 = vmatpush2.msra.mxu0 0.0
    %85 = vmatprep.subr.mxu0 0.0
    %86 = vmatpush2.msra.mxu0 0.0
    %87 = vmatprep.subr.mxu0 0.0
    %88 = vmatpush2.msra.mxu0 0.0
    %89 = vmatprep.subr.mxu0 0.0
    %90 = vmatpush2.msra.mxu0 0.0
    %91 = vmatprep.subr.mxu0 0.0
    %92 = vmatpush2.msra.mxu0 0.0
    %93 = vmatprep.subr.mxu0 0.0
    %94 = vmatpush2.msra.mxu0 0.0
    %95 = vmatprep.subr.mxu0 0.0
    %96 = vmatpush2.msra.mxu0 0.0
    %97 = vmatprep.subr.mxu0 0.0
    %98 = vmatpush2.msra.mxu0 0.0
    %99 = vmatprep.subr.mxu0 0.0
    %100 = vmatpush2.msra.mxu0 0.0
    %101 = vmatprep.subr.mxu0 0.0
    %102 = vmatpush2.msra.mxu0 0.0
    %103 = vmatprep.subr.mxu0 0.0
    %104 = vmatpush2.msra.mxu0 0.0
    %105 = vmatprep.subr.mxu0 0.0
    %106 = vmatpush2.msra.mxu0 0.0
    %107 = vmatprep.subr.mxu0 0.0
    %108 = vmatpush2.msra.mxu0 0.0
    %109 = vmatprep.mubr.f32.mxu0 0.0
    %110 = vmatmul.mubr.f32.gmra.mxu0 %v21
    %v111 = vpop.f32.mrf.mxu0
    %v112 = vadd.f32 %v43, %v111
    %v113 = vpop.f32.mrf.mxu0
    %114 = vdwg.mxu0
    %v115 = vmul.f32 %v112, %v112
    %v116 = vld [vmem:[%s3] sm:$0xff]
    %v117 = vld [vmem:[%s3 + $0x8] sm:$0xff]
    %v118 = vld [vmem:[%s3 + $0x10] sm:$0xff]
    %v119 = vld [vmem:[%s3 + $0x18] sm:$0xff]
    %v120 = vld [vmem:[%s3 + $0x20] sm:$0xff]
    %v121 = vld [vmem:[%s3 + $0x28] sm:$0xff]
    %v122 = vld [vmem:[%s3 + $0x30] sm:$0xff]
    %v123 = vld [vmem:[%s3 + $0x38] sm:$0xff]
    %v124 = vld [vmem:[%s3 + $0x40] sm:$0xff]
    %v125 = vld [vmem:[%s3 + $0x48] sm:$0xff]
    %v126 = vld [vmem:[%s3 + $0x50] sm:$0xff]
    %v127 = vld [vmem:[%s3 + $0x58] sm:$0xff]
    %v128 = vld [vmem:[%s3 + $0x60] sm:$0xff]
    %v129 = vld [vmem:[%s3 + $0x68] sm:$0xff]
    %v130 = vld [vmem:[%s3 + $0x70] sm:$0xff]
    %v131 = vld [vmem:[%s3 + $0x78] sm:$0xff]
    %v132 = vld [vmem:[%s4] sm:$0x1]
    %v134 = vlaneseq
    %v135 = vshrl.u32 %v134, 7
    %v136 = vsub.s32 0, %v135
    %v137 = vrot.slane %v132, %v136
    %139 = vmatprep.subr.mxu0 0.0
    %140 = vmatpush1.msra.mxu0 %v131
    %141 = vmatprep.subr.mxu0 0.0
    %142 = vmatpush1.msra.mxu0 %v130
    %143 = vmatprep.subr.mxu0 0.0
    %144 = vmatpush1.msra.mxu0 %v129
    %145 = vmatprep.subr.mxu0 0.0
    %146 = vmatpush1.msra.mxu0 %v128
    %147 = vmatprep.subr.mxu0 0.0
    %148 = vmatpush1.msra.mxu0 %v127
    %149 = vmatprep.subr.mxu0 0.0
    %150 = vmatpush1.msra.mxu0 %v126
    %151 = vmatprep.subr.mxu0 0.0
    %152 = vmatpush1.msra.mxu0 %v125
    %153 = vmatprep.subr.mxu0 0.0
    %154 = vmatpush1.msra.mxu0 %v124
    %155 = vmatprep.subr.mxu0 0.0
    %156 = vmatpush1.msra.mxu0 %v123
    %157 = vmatprep.subr.mxu0 0.0
    %158 = vmatpush1.msra.mxu0 %v122
    %159 = vmatprep.subr.mxu0 0.0
    %160 = vmatpush1.msra.mxu0 %v121
    %161 = vmatprep.subr.mxu0 0.0
    %162 = vmatpush1.msra.mxu0 %v120
    %163 = vmatprep.subr.mxu0 0.0
    %164 = vmatpush1.msra.mxu0 %v119
    %165 = vmatprep.subr.mxu0 0.0
    %166 = vmatpush1.msra.mxu0 %v118
    %167 = vmatprep.subr.mxu0 0.0
    %168 = vmatpush1.msra.mxu0 %v117
    %169 = vmatprep.subr.mxu0 0.0
    %170 = vmatpush1.msra.mxu0 %v116
    %171 = vmatprep.subr.mxu0 0.0
    %172 = vmatpush2.msra.mxu0 0.0
    %173 = vmatprep.subr.mxu0 0.0
    %174 = vmatpush2.msra.mxu0 0.0
    %175 = vmatprep.subr.mxu0 0.0
    %176 = vmatpush2.msra.mxu0 0.0
    %177 = vmatprep.subr.mxu0 0.0
    %178 = vmatpush2.msra.mxu0 0.0
    %179 = vmatprep.subr.mxu0 0.0
    %180 = vmatpush2.msra.mxu0 0.0
    %181 = vmatprep.subr.mxu0 0.0
    %182 = vmatpush2.msra.mxu0 0.0
    %183 = vmatprep.subr.mxu0 0.0
    %184 = vmatpush2.msra.mxu0 0.0
    %185 = vmatprep.subr.mxu0 0.0
    %186 = vmatpush2.msra.mxu0 0.0
    %187 = vmatprep.subr.mxu0 0.0
    %188 = vmatpush2.msra.mxu0 0.0
    %189 = vmatprep.subr.mxu0 0.0
    %190 = vmatpush2.msra.mxu0 0.0
    %191 = vmatprep.subr.mxu0 0.0
    %192 = vmatpush2.msra.mxu0 0.0
    %193 = vmatprep.subr.mxu0 0.0
    %194 = vmatpush2.msra.mxu0 0.0
    %195 = vmatprep.subr.mxu0 0.0
    %196 = vmatpush2.msra.mxu0 0.0
    %197 = vmatprep.subr.mxu0 0.0
    %198 = vmatpush2.msra.mxu0 0.0
    %199 = vmatprep.subr.mxu0 0.0
    %200 = vmatpush2.msra.mxu0 0.0
    %201 = vmatprep.subr.mxu0 0.0
    %202 = vmatpush2.msra.mxu0 0.0
    %203 = vmatprep.mubr.f32.mxu0 0.0
    %204 = vmatmul.mubr.f32.gmra.mxu0 %v115
    %v205 = vpop.f32.mrf.mxu0
    %v206 = vadd.f32 %v137, %v205
    %v207 = vpop.f32.mrf.mxu0
    %208 = vdwg.mxu0
    %v209 = vmul.f32 %v206, %v206
    %v210 = vadd.f32 %v209, %v21
    %211 = vst [vmem:[#allocation2] sm:$0xff] %v210
    // Predicated region
    $region22: #{residual_block.1} parent=1 // pred_check
      _
    $region23: #{residual_block.1} parent=1 // pred_check_branch
      %213 = sbr.rel (0) target = $region25
    $region24: #{residual_block.1} parent=1 // pred_region
      %s215 = ssub.s32 128, 128
      %216 = vsyncadd [#allocation3], %s215
      %s218 = sshll.u32 [#allocation2], 4
      %s219 = int_to_ptr.vmem [resolvable:$true] %s218
      %221 = dma.vmem_to_hbm [thread:$0]  %s219, 128, %s5, [#allocation3]
    $region25: #{residual_block.1} parent=1 // pred_fallthru
      _
    // Predicated region
    $region26: #{residual_block.1} parent=1 // pred_check
      _
    $region27: #{residual_block.1} parent=1 // pred_check_branch
      %223 = sbr.rel (0) target = $region29
    $region28: #{residual_block.1} parent=1 // pred_region
      %224 = dma.done [#allocation3], 128
    $region29: #{residual_block.1} parent=1 // pred_fallthru
      _
    %225 = vsyncpa [#allocation3], 1

</llo_original>
